<compile_context>
chip_gen: v5e
topology: v5e:2x2
jax: 0.10.0
libtpu: 0.0.40
codegen_flags: <defaults>
</compile_context>

<pallas_src>
import functools

import jax
import jax.numpy as jnp
from jax import lax
from jax.experimental import pallas as pl
from jax.experimental.pallas import tpu as pltpu


def _cam_kernel(gamma_ref, x_full_ref, o_ref, attn_ref, *,
                tc, n_tile, num_r, num_n, compute_dtype):
    """One (batch, channel-row-block, n-chunk) grid step.

    gamma_ref:  (1,) f32 in SMEM.
    x_full_ref: (1, C, N_pad) block, VMEM-resident across (r, n) for a batch.
    o_ref:      (1, tc, n_tile) output chunk.
    attn_ref:   (tc, C) VMEM scratch in the MXU input dtype; persists across
                grid steps, recomputed whenever n == 0 (i.e. once per (b, r)).
    """
    r = pl.program_id(1)
    n = pl.program_id(2)

    # Static Python branches: dynamic-slice paths are only traced when the
    # corresponding grid axis is non-trivial.
    if num_r == 1:
        row_idx = slice(None)
    else:
        row_idx = pl.ds(pl.multiple_of(r * tc, tc), tc)
    if num_n == 1:
        col_idx = slice(None)
    else:
        col_idx = pl.ds(pl.multiple_of(n * n_tile, n_tile), n_tile)

    @pl.when(n == 0)
    def _compute_attention():
        x_all = x_full_ref[0].astype(compute_dtype)                 # (C, N)
        x_rows = x_full_ref[0, row_idx, :].astype(compute_dtype)    # (tc, N)
        # energy_rows = x_rows @ x_all^T without materializing a transpose:
        # contract axis 1 of BOTH operands, f32 accumulation on the MXU.
        energy = lax.dot_general(
            x_rows, x_all,
            dimension_numbers=(((1,), (1,)), ((), ())),
            preferred_element_type=jnp.float32)                     # (tc, C)
        # softmax(rowmax(E) - E) is shift-invariant per row; the numerically
        # stable form collapses to exp(rowmin(E) - E) / sum.
        row_min = jnp.min(energy, axis=-1, keepdims=True)
        exps = jnp.exp(row_min - energy)
        denom = jnp.sum(exps, axis=-1, keepdims=True)
        attn = exps * pl.reciprocal(denom, approx=True)             # EUP slot
        # Cast to the MXU input dtype exactly once; the per-step GEMM below
        # then consumes it directly (no repeated C^2 VPU cast).
        attn_ref[...] = attn.astype(attn_ref.dtype)

    # V chunk + residual chunk are slices of the resident slab: x is read from
    # HBM exactly once per batch (no second streamed copy).
    x_res = x_full_ref[0, row_idx, col_idx]                         # (tc, n_tile)
    if num_r == 1:
        x_chunk = x_res.astype(compute_dtype)                       # (C, n_tile)
    else:
        x_chunk = x_full_ref[0, :, col_idx].astype(compute_dtype)   # (C, n_tile)

    out = jnp.dot(attn_ref[...], x_chunk,
                  preferred_element_type=jnp.float32)               # (tc, n_tile)
    gamma = gamma_ref[0]
    o_ref[0] = (gamma * out + x_res.astype(jnp.float32)).astype(o_ref.dtype)


def _round_up(x, m):
    return ((x + m - 1) // m) * m


def _vmem_budget_bytes():
    """(physical_cap, usable_budget) for the current TPU generation.

    ~25% headroom is left for compiler-internal scratch: ~96 MiB on the
    128 MiB v5e/v6e, ~48 MiB on the 64 MiB-per-core v7x (no hard 64 MiB clamp
    that starved v5e/v6e in the previous version).
    """
    try:
        cap = int(pltpu.get_tpu_info().vmem_capacity_bytes)
    except Exception:
        cap = 64 << 20  # conservative fallback (v7x per-core physical VMEM)
    return cap, cap - cap // 4


def _pick_row_tile(B, C):
    """Channel-row block size: split rows only when batch parallelism alone
    cannot keep a two-TensorCore chip (v7x) busy; a single row block (no-op)
    otherwise and on single-core v5e/v6e."""
    if B >= 2 or C < 256 or C % 16 != 0:
        return C
    return C // 2


def _pick_tiles(B, C, N, itemsize, budget):
    """(tc, n_tile, n_pad): lane-dense n chunk chosen against the VMEM budget.

    n_pad rounds N up to a multiple of 128 so every output store is an
    unmasked, lane-dense vst; n_tile is the largest 128-multiple divisor of
    n_pad whose footprint (double-buffered resident slab + double-buffered
    output chunk + attention scratch + f32 temporaries) fits the budget.
    """
    tc = _pick_row_tile(B, C)
    n_pad = _round_up(N, 128)
    candidates = [d for d in range(128, n_pad + 1, 128) if n_pad % d == 0]
    slab = 2 * C * n_pad * itemsize           # double-buffered resident x slab
    attn = tc * C * itemsize                  # attention scratch
    for n_tile in sorted(candidates, reverse=True):
        out_chunk = 2 * tc * n_tile * itemsize
        temps = 4 * tc * C * 4 + 3 * tc * n_tile * 4 + (2 << 20)
        if slab + out_chunk + attn + temps <= budget:
            return tc, n_tile, n_pad
    # TODO(synk): two-pass streamed-energy variant (memory_space=pl.ANY +
    # emit_pipeline) for slabs that do not fit even with n_tile=128.
    return tc, 128, n_pad


def cam_module(x_nchw, gamma, *, gemm_dtype=None):
    """CAM_Module forward: gamma * (softmax(rowmax(E) - E) @ V) + x,
    with E = X @ X^T over flattened spatial dims.

    gemm_dtype: optional MXU input dtype override (e.g. jnp.bfloat16 for f32
    inputs on v6e/v7x for ~4x GEMM throughput at reduced precision).
    """
    B, C, H, W = x_nchw.shape
    N = H * W
    itemsize = jnp.dtype(x_nchw.dtype).itemsize
    compute_dtype = jnp.dtype(gemm_dtype) if gemm_dtype is not None else x_nchw.dtype

    cap, budget = _vmem_budget_bytes()
    tc, n_tile, n_pad = _pick_tiles(B, C, N, itemsize, budget)
    num_r = C // tc
    num_n = n_pad // n_tile

    x_flat = x_nchw.reshape(B, C, N)
    if n_pad != N:
        # Zero padding is inert: it adds nothing to E = X @ X^T and the padded
        # output columns are sliced off below.
        x_flat = jnp.pad(x_flat, ((0, 0), (0, 0), (0, n_pad - N)))

    need = (2 * C * n_pad * itemsize + 2 * tc * n_tile * itemsize
            + tc * C * itemsize + 4 * tc * C * 4 + 3 * tc * n_tile * 4
            + (2 << 20))
    vmem_limit = int(min(cap, max(budget, need)))

    cost = pl.CostEstimate(
        # energy GEMM + attention GEMM (+ epilogue) per batch.
        flops=4 * B * C * C * n_pad + 3 * B * C * n_pad,
        transcendentals=B * C * C + B * C,
        # x read once, out written once (second x stream eliminated).
        bytes_accessed=2 * B * C * n_pad * itemsize + 4,
    )

    kernel = functools.partial(
        _cam_kernel, tc=tc, n_tile=n_tile, num_r=num_r, num_n=num_n,
        compute_dtype=compute_dtype)

    out_flat = pl.pallas_call(
        kernel,
        out_shape=jax.ShapeDtypeStruct((B, C, n_pad), x_nchw.dtype),
        grid_spec=pltpu.PrefetchScalarGridSpec(
            num_scalar_prefetch=0,
            grid=(B, num_r, num_n),
            in_specs=[
                # gamma: (1,) scalar parameter, placed in SMEM.
                pl.BlockSpec(memory_space=pltpu.MemorySpace.SMEM),
                # x: full (C, N_pad) slab, resident across (r, n) for a batch.
                pl.BlockSpec((1, C, n_pad), lambda b, r, n: (b, 0, 0)),
            ],
            out_specs=pl.BlockSpec((1, tc, n_tile), lambda b, r, n: (b, r, n)),
            scratch_shapes=[pltpu.VMEM((tc, C), compute_dtype)],
        ),
        compiler_params=pltpu.CompilerParams(
            dimension_semantics=("parallel", "parallel", "arbitrary"),
            vmem_limit_bytes=vmem_limit),
        cost_estimate=cost,
    )(jnp.asarray(gamma, jnp.float32).reshape(1), x_flat)

    if n_pad != N:
        out_flat = out_flat[:, :, :N]
    return out_flat.reshape(B, C, H, W)


def cam_reference(x_nchw, gamma):
    """Pure-JAX reference mirroring the PyTorch forward. HIGHEST-precision
    matmuls so the comparison isolates kernel error rather than XLA's
    default reduced-precision einsum rounding."""
    B, C, H, W = x_nchw.shape
    q = x_nchw.reshape(B, C, -1)                        # (B, C, N)
    k = jnp.transpose(q, (0, 2, 1))                     # (B, N, C)
    energy = jnp.einsum("bcn,bnk->bck", q, k, precision=lax.Precision.HIGHEST)
    energy_new = jnp.max(energy, axis=-1, keepdims=True) - energy
    attn = jax.nn.softmax(energy_new, axis=-1)
    out = jnp.einsum("bck,bkn->bcn", attn, q,
                     precision=lax.Precision.HIGHEST).reshape(B, C, H, W)
    return gamma[0] * out + x_nchw


if __name__ == "__main__":
    key = jax.random.PRNGKey(0)
    B, C, H, W = 2, 4, 16, 16
    x = jax.random.normal(key, (B, C, H, W), dtype=jnp.float32)

    # nn.Parameter(torch.zeros(1)) has shape (1,); use a nonzero deterministic
    # value so the attention path actually contributes to the output.
    gamma = jnp.array([0.5], dtype=jnp.float32)

    out = jax.block_until_ready(cam_module(x, gamma))
    ref = cam_reference(x, gamma)

    assert out.shape == (B, C, H, W)
    assert out.dtype == x.dtype
    max_err = float(jnp.max(jnp.abs(out - ref)))
    # Tolerance absorbs the approx (EUP) reciprocal in the softmax denominator.
    assert jnp.allclose(out, ref, atol=5e-3, rtol=5e-3), max_err

    print("KERNEL_OK")
</pallas_src>

<mosaic_0001>
module attributes {stable_mosaic.version = 11 : i64} {
  func.func @_cam_kernel(%arg0: i32, %arg1: i32, %arg2: i32, %arg3: memref<1xf32, #tpu.memory_space<smem>>, %arg4: memref<1x4x256xf32, #tpu.memory_space<vmem>>, %arg5: memref<1x4x256xf32, #tpu.memory_space<vmem>>, %arg6: memref<4x4xf32, #tpu.memory_space<vmem>>) attributes {dimension_semantics = [#tpu.dimension_semantics<parallel>, #tpu.dimension_semantics<parallel>, #tpu.dimension_semantics<arbitrary>], iteration_bounds = array<i64: 2, 1, 1>, scalar_prefetch = 0 : i64, scratch_operands = 1 : i64, tpu.core_type = #tpu.core_type<tc>, window_params = [{transform_indices = @transform_0, window_bounds = array<i64: 1>}, {transform_indices = @transform_1, window_bounds = array<i64: 1, 4, 256>}, {transform_indices = @transform_2, window_bounds = array<i64: 1, 4, 256>}]} {
    %c0_i32 = arith.constant 0 : i32
    %0 = arith.cmpi eq, %arg2, %c0_i32 : i32
    %1 = arith.extui %0 : i1 to i32
    %c0_i32_0 = arith.constant 0 : i32
    %2 = arith.cmpi ne, %1, %c0_i32_0 : i32
    scf.if %2 {
      %c0_9 = arith.constant 0 : index
      %c0_10 = arith.constant 0 : index
      %c0_11 = arith.constant 0 : index
      %14 = vector.load %arg4[%c0_9, %c0_10, %c0_11] : memref<1x4x256xf32, #tpu.memory_space<vmem>>, vector<1x4x256xf32>
      %15 = vector.shape_cast %14 : vector<1x4x256xf32> to vector<4x256xf32>
      %c0_12 = arith.constant 0 : index
      %c0_13 = arith.constant 0 : index
      %c0_14 = arith.constant 0 : index
      %16 = vector.load %arg4[%c0_12, %c0_13, %c0_14] : memref<1x4x256xf32, #tpu.memory_space<vmem>>, vector<1x4x256xf32>
      %17 = vector.shape_cast %16 : vector<1x4x256xf32> to vector<4x256xf32>
      %cst_15 = arith.constant dense<0.000000e+00> : vector<4x4xf32>
      %18 = tpu.matmul %17, %15, %cst_15 {dimension_numbers = #tpu.dot_dimension_numbers<[1], [1], [0], [0], [0, 0, 1, 0], [], []>} : vector<4x256xf32>, vector<4x256xf32>, vector<4x4xf32> -> vector<4x4xf32>
      %cst_16 = arith.constant dense<0x7F800000> : vector<4xf32>
      %19 = vector.multi_reduction <minimumf>, %18, %cst_16 [1] : vector<4x4xf32> to vector<4xf32>
      %20 = vector.shape_cast %19 : vector<4xf32> to vector<4x1xf32>
      %21 = vector.broadcast %20 : vector<4x1xf32> to vector<4x4xf32>
      %22 = arith.subf %21, %18 : vector<4x4xf32>
      %23 = math.exp %22 : vector<4x4xf32>
      %cst_17 = arith.constant dense<0.000000e+00> : vector<4xf32>
      %24 = vector.multi_reduction <add>, %23, %cst_17 [1] : vector<4x4xf32> to vector<4xf32>
      %25 = vector.shape_cast %24 : vector<4xf32> to vector<4x1xf32>
      %26 = tpu.reciprocal %25 {approx = true} : vector<4x1xf32> -> vector<4x1xf32>
      %27 = vector.broadcast %26 : vector<4x1xf32> to vector<4x4xf32>
      %28 = arith.mulf %23, %27 : vector<4x4xf32>
      %c0_18 = arith.constant 0 : index
      %c0_19 = arith.constant 0 : index
      %29 = vector.load %arg6[%c0_18, %c0_19] : memref<4x4xf32, #tpu.memory_space<vmem>>, vector<4x4xf32>
      tpu.vector_store %arg6[%c0_18, %c0_19], %28 {strides = array<i32>} : memref<4x4xf32, #tpu.memory_space<vmem>>, vector<4x4xf32>,
    } else {
    }
    %c0 = arith.constant 0 : index
    %c0_1 = arith.constant 0 : index
    %c0_2 = arith.constant 0 : index
    %3 = vector.load %arg4[%c0, %c0_1, %c0_2] : memref<1x4x256xf32, #tpu.memory_space<vmem>>, vector<1x4x256xf32>
    %4 = vector.shape_cast %3 : vector<1x4x256xf32> to vector<4x256xf32>
    %c0_3 = arith.constant 0 : index
    %c0_4 = arith.constant 0 : index
    %5 = vector.load %arg6[%c0_3, %c0_4] : memref<4x4xf32, #tpu.memory_space<vmem>>, vector<4x4xf32>
    %cst = arith.constant dense<0.000000e+00> : vector<4x256xf32>
    %6 = tpu.matmul %5, %4, %cst {dimension_numbers = #tpu.dot_dimension_numbers<[1], [0], [0], [1], [0, 0, 1, 1], [], []>} : vector<4x4xf32>, vector<4x256xf32>, vector<4x256xf32> -> vector<4x256xf32>
    %c0_5 = arith.constant 0 : index
    %7 = memref.load %arg3[%c0_5] : memref<1xf32, #tpu.memory_space<smem>>
    %8 = vector.broadcast %7 : f32 to vector<4x256xf32>
    %9 = arith.mulf %8, %6 : vector<4x256xf32>
    %10 = arith.addf %9, %4 : vector<4x256xf32>
    %c0_6 = arith.constant 0 : index
    %c0_7 = arith.constant 0 : index
    %c0_8 = arith.constant 0 : index
    %11 = vector.load %arg5[%c0_6, %c0_7, %c0_8] : memref<1x4x256xf32, #tpu.memory_space<vmem>>, vector<1x4x256xf32>
    %12 = vector.shape_cast %11 : vector<1x4x256xf32> to vector<4x256xf32>
    %13 = vector.shape_cast %10 : vector<4x256xf32> to vector<1x4x256xf32>
    tpu.vector_store %arg5[%c0_6, %c0_7, %c0_8], %13 {strides = array<i32>} : memref<1x4x256xf32, #tpu.memory_space<vmem>>, vector<1x4x256xf32>,
    return
  }
  func.func @transform_0(%arg0: i32, %arg1: i32, %arg2: i32) -> i32 {
    %c0_i32 = arith.constant 0 : i32
    %c0_i32_0 = arith.constant 0 : i32
    return %c0_i32 : i32
  }
  func.func @transform_1(%arg0: i32, %arg1: i32, %arg2: i32) -> (i32, i32, i32) {
    %c0_i32 = arith.constant 0 : i32
    %c0_i32_0 = arith.constant 0 : i32
    %c0_i32_1 = arith.constant 0 : i32
    return %arg0, %c0_i32, %c0_i32_0 : i32, i32, i32
  }
  func.func @transform_2(%arg0: i32, %arg1: i32, %arg2: i32) -> (i32, i32, i32) {
    %c0_i32 = arith.constant 0 : i32
    return %arg0, %arg1, %arg2 : i32, i32, i32
  }
}

</mosaic_0001>

<llo_original>
// kernel: tpu_custom_call.1
$region0: #{tpu_custom_call.1}
  #allocation0 [shape = 'u32[]', space=smem, size = 0x4, offset = 0x4, fixed_abs, tag = 'smem constant byte address 0x4 - core index']
  #allocation1 [shape = 'u32[72,128]{1,0:T(1,128)}', space=vmem, size = 0x9000, scoped, tag = 'internal scratch']
  #allocation2 [shape = 'f32[4,4]{1,0:T(4,128)}', space=vmem, size = 0x800, scoped, tag = 'scratch operand']
  #allocation3 [shape = 'f32[1]{0:T(128)S(6)}', space=smem, size = 0x200, scoped, tag = 'scoped memory for tpu_custom_call.1']
  %s0 = inlined_call_operand.<no memory space> [shape: f32[1], index: 0, kind: input, shape index: {}]
  %s1 = inlined_call_operand.hbm [shape: f32[2,4,256], index: 1, kind: input, shape index: {}]
  %s2 = inlined_call_operand.hbm [shape: f32[2,4,256], index: 2, kind: output, shape index: {}]
  %s3 = sld [smem:[#allocation0]]
  $region49: #{tpu_custom_call.1} parent=0
    _
  %s5 = ssub.s32 1, %s3
  %s6 = scalar_select 0, %s5, %s3
  %7 = sst [smem:[#allocation3]] %s0
  $region1: #{tpu_custom_call.1} parent=0
    #allocation4 [shape = 'u8[8192]{0}', space=vmem, size = 0x2000, scoped, tag = 'input window, operand 1']
    #allocation5 [shape = 's32[2]{0}', space=sflag, size = 0x8, scoped, tag = 'scoped memory for tpu_custom_call.1']
    #allocation6 [shape = 's32[2]{0}', space=sflag, size = 0x8, scoped, tag = 'scoped memory for tpu_custom_call.1']
    #allocation7 [shape = 'u8[8192]{0}', space=vmem, size = 0x2000, scoped, tag = 'output window, operand 0']
    %8 = vsyncpa [#allocation5], 0
    %s9 = scalar_lea.sflag [#allocation5], 1
    %10 = vsyncpa %s9, 0
    %11 = vsyncpa [#allocation6], 0
    %s12 = scalar_lea.sflag [#allocation6], 1
    %13 = vsyncpa %s12, 0
    loop: start=0, step=1, limit=4
    $region2: #{tpu_custom_call.1} parent=1 // loop_pre_header
      _
    $region3: #{tpu_custom_call.1} parent=1 // loop_header
      %s15 = sphi 0, %s19
      %p16 = scmp.ge.s32.totalorder %s15, 4
      %s22 = sphi 0, %s41
      %s23 = sphi 0, %s37
      %s24 = sphi 0, %s33
      %s25 = sphi 0, %s22
      %s26 = sphi 0, %s23
      %s27 = sphi 0, %s24
      %s28 = sphi 0, %s25
      %s29 = sphi 0, %s26
      %s30 = sphi 0, %s27
      %s42 = sphi 0, %s42
      %s44 = sphi 0, %s42
      %s45 = sphi 0, %s44
      %s59 = sphi 0, %s45
      %s65 = sphi 0, %s67
      %s68 = sphi 0, %s65
      %s69 = sphi 0, %s68
      %s85 = sphi 0, %s69
      %s95 = sphi 0, %s97
      %s98 = sphi 0, %s95
      %s99 = sphi 0, %s98
      %s115 = sphi 0, %s99
    $region4: #{tpu_custom_call.1} parent=1 // loop_header_branch
      %18 = sbr.rel (%p16) target = $region8
    $region5: #{tpu_custom_call.1} parent=1 // loop_body
      %s20 = ssub.s32 %s15, 1
      %s21 = ssub.s32 %s15, 2
      %s31 = sadd.s32 1, %s24
      %p32 = scmp.ge.s32.totalorder %s31, 1
      %s33 = scalar_select %p32, 0, %s31
      %s34 = sadd.s32 1, %s23
      %s35 = scalar_select %p32, %s34, %s23
      %p36 = scmp.ge.s32.totalorder %s35, 1
      %s37 = scalar_select %p36, 0, %s35
      %s38 = sadd.s32 1, %s22
      %s39 = scalar_select %p36, %s38, %s22
      %p40 = scmp.ge.s32.totalorder %s39, 2
      %s41 = scalar_select %p40, 0, %s39
      %s43 = sadd.s32 %s42, 1
      %p46 = scmp.eq.s32.totalorder %s15, 1
      %p47 = scmp.ne.s32.totalorder %s42, %s44
      %p48 = scmp.eq.s32.totalorder %s15, 0
      %p49 = por %p47, %p48
      %p50 = scmp.ne.s32.totalorder %s42, %s44
      %p51 = scmp.eq.s32.totalorder %s20, 1
      %p52 = por %p50, %p51
      %p53 = scmp.ne.s32.totalorder %s44, %s45
      %p54 = scmp.eq.s32.totalorder %s20, 0
      %p55 = por %p53, %p54
      %p56 = scmp.ne.s32.totalorder %s44, %s45
      %p57 = scmp.eq.s32.totalorder %s21, 1
      %p58 = por %p56, %p57
      %p60 = scmp.ne.s32.totalorder %s45, %s59
      %p61 = scmp.eq.s32.totalorder %s21, 0
      %p62 = por %p60, %p61
      %s63 = ssub.s32 %s22, %s41
      %p64 = scmp.eq.s32.totalorder %s63, 0
      %s66 = sadd.s32 %s65, 1
      %s67 = scalar_select %p64, %s65, %s66
      %p70 = pneg %p64
      %p71 = scmp.eq.s32.totalorder %s15, 1
      %p72 = por %p70, %p71
      %p73 = scmp.ne.s32.totalorder %s65, %s68
      %p74 = scmp.eq.s32.totalorder %s15, 0
      %p75 = por %p73, %p74
      %p76 = scmp.ne.s32.totalorder %s65, %s68
      %p77 = scmp.eq.s32.totalorder %s20, 1
      %p78 = por %p76, %p77
      %p79 = scmp.ne.s32.totalorder %s68, %s69
      %p80 = scmp.eq.s32.totalorder %s20, 0
      %p81 = por %p79, %p80
      %p82 = scmp.ne.s32.totalorder %s68, %s69
      %p83 = scmp.eq.s32.totalorder %s21, 1
      %p84 = por %p82, %p83
      %p86 = scmp.ne.s32.totalorder %s69, %s85
      %p87 = scmp.eq.s32.totalorder %s21, 0
      %p88 = por %p86, %p87
      %s89 = ssub.s32 %s22, %s41
      %s90 = ssub.s32 %s23, %s37
      %s91 = sor.u32 %s89, %s90
      %s92 = ssub.s32 %s24, %s33
      %s93 = sor.u32 %s91, %s92
      %p94 = scmp.eq.s32.totalorder %s93, 0
      %s96 = sadd.s32 %s95, 1
      %s97 = scalar_select %p94, %s95, %s96
      %p100 = pneg %p94
      %p101 = scmp.eq.s32.totalorder %s15, 1
      %p102 = por %p100, %p101
      %p103 = scmp.ne.s32.totalorder %s95, %s98
      %p104 = scmp.eq.s32.totalorder %s15, 0
      %p105 = por %p103, %p104
      %p106 = scmp.ne.s32.totalorder %s95, %s98
      %p107 = scmp.eq.s32.totalorder %s20, 1
      %p108 = por %p106, %p107
      %p109 = scmp.ne.s32.totalorder %s98, %s99
      %p110 = scmp.eq.s32.totalorder %s20, 0
      %p111 = por %p109, %p110
      %p112 = scmp.ne.s32.totalorder %s98, %s99
      %p113 = scmp.eq.s32.totalorder %s21, 1
      %p114 = por %p112, %p113
      %p116 = scmp.ne.s32.totalorder %s99, %s115
      %p117 = scmp.eq.s32.totalorder %s21, 0
      %p118 = por %p116, %p117
      %p119 = scmp.le.s32.totalorder 1, %s15
      %p120 = scmp.lt.s32.totalorder %s15, 3
      %p121 = pnand %p119, %p120
      %p122 = pneg %p121
      // Predicated region
      $region9: #{tpu_custom_call.1} parent=5 // pred_check
        _
      $region10: #{tpu_custom_call.1} parent=5 // pred_check_branch
        %124 = sbr.rel (%p121) target = $region12
      $region11: #{tpu_custom_call.1} parent=5 // pred_region
        %s125 = ssub.s32 %s15, 1
        // Predicated region
        $region13: #{tpu_custom_call.1} parent=11 // pred_check
          %p126 = pneg %p55
        $region14: #{tpu_custom_call.1} parent=11 // pred_check_branch
          %128 = sbr.rel (%p126) target = $region16
        $region15: #{tpu_custom_call.1} parent=11 // pred_region
          _
        $region16: #{tpu_custom_call.1} parent=11 // pred_fallthru
          _
      $region12: #{tpu_custom_call.1} parent=5 // pred_fallthru
        _
      %p129 = scmp.lt.s32.totalorder %s15, 2
      // Predicated region
      $region17: #{tpu_custom_call.1} parent=5 // pred_check
        %p130 = pneg %p129
      $region18: #{tpu_custom_call.1} parent=5 // pred_check_branch
        %132 = sbr.rel (%p130) target = $region20
      $region19: #{tpu_custom_call.1} parent=5 // pred_region
        // Predicated region
        $region21: #{tpu_custom_call.1} parent=19 // pred_check
          %p133 = pneg %p75
        $region22: #{tpu_custom_call.1} parent=19 // pred_check_branch
          %135 = sbr.rel (%p133) target = $region24
        $region23: #{tpu_custom_call.1} parent=19 // pred_region
          %s136 = sand.u32 %s65, 1
          %s137 = scalar_lea.sflag [#allocation5], %s136
          %s138 = sand.u32 %s65, 1
          %s139 = smul.addr %s138, 8
          %s140 = scalar_lea.vmem [#allocation4], %s139
          %142 = vsyncadd %s137, 0
          %s143 = smul.addr %s22, 2
          %s144 = smul.addr %s143, 4
          %s145 = scalar_lea.hbm %s1, %s144
          %s147 = sshll.u32 %s145, 4
          %s148 = int_to_ptr.hbm [resolvable:$true] %s147
          %s149 = sshll.u32 %s140, 4
          %s150 = int_to_ptr.vmem [resolvable:$true] %s149
          %152 = dma.hbm_to_vmem [thread:$0]  %s148, 128, %s150, %s137
        $region24: #{tpu_custom_call.1} parent=19 // pred_fallthru
          _
      $region20: #{tpu_custom_call.1} parent=5 // pred_fallthru
        _
      %p153 = scmp.le.s32.totalorder 1, %s15
      %p154 = scmp.lt.s32.totalorder %s15, 3
      %p155 = pnand %p153, %p154
      %p156 = pneg %p155
      // Predicated region
      $region25: #{tpu_custom_call.1} parent=5 // pred_check
        _
      $region26: #{tpu_custom_call.1} parent=5 // pred_check_branch
        %158 = sbr.rel (%p155) target = $region28
      $region27: #{tpu_custom_call.1} parent=5 // pred_region
        %s159 = ssub.s32 %s15, 1
        %s160 = sand.u32 %s68, 1
        %s161 = scalar_lea.sflag [#allocation5], %s160
        %s162 = sand.u32 %s68, 1
        %s163 = smul.addr %s162, 8
        %s164 = scalar_lea.vmem [#allocation4], %s163
        // Predicated region
        $region29: #{tpu_custom_call.1} parent=27 // pred_check
          %p165 = pneg %p81
        $region30: #{tpu_custom_call.1} parent=27 // pred_check_branch
          %167 = sbr.rel (%p165) target = $region32
        $region31: #{tpu_custom_call.1} parent=27 // pred_region
          %169 = dma.done %s161, 128
        $region32: #{tpu_custom_call.1} parent=27 // pred_fallthru
          _
        %p170 = pneg %p55
        %p171 = pneg %p52
        %s172 = sand.u32 %s68, 1
        %s173 = scalar_lea.sflag [#allocation5], %s172
        %s174 = sand.u32 %s68, 1
        %s175 = smul.addr %s174, 8
        %s176 = scalar_lea.vmem [#allocation4], %s175
        %p177 = pneg %p81
        %p178 = pneg %p78
        %p179 = pneg %p111
        %p180 = pneg %p108
        %s181 = sand.u32 %s98, 1
        %s182 = scalar_lea.sflag [#allocation6], %s181
        %s183 = sand.u32 %s98, 1
        %s184 = smul.addr %s183, 8
        %s185 = scalar_lea.vmem [#allocation7], %s184
        %s186 = smul.u32 2, %s27
        %p187 = scmp.eq.s32.totalorder %s27, 0
        // Predicated region
        $region33: #{tpu_custom_call.1} parent=27 // pred_check
          %p188 = pneg %p187
        $region34: #{tpu_custom_call.1} parent=27 // pred_check_branch
          %190 = sbr.rel (%p188) target = $region36
        $region35: #{tpu_custom_call.1} parent=27 // pred_region
          %v191 = vld [vmem:[%s164] sm:$0xff]
          %193 = vst [vmem:[#allocation1] ss:$2 sm:$0xff] %v191
          %v194 = vld.sshfl [vmem:[#allocation1] sm:$0xff pattern:$0x75316420]
          %v195 = vld.sshfl [vmem:[#allocation1 + $0x8] sm:$0xff pattern:$0x75316420]
          %198 = vst [vmem:[#allocation1] ss:$2 sm:$0xff] %v191
          %v199 = vld.sshfl [vmem:[#allocation1] sm:$0xff pattern:$0x75316420]
          %v200 = vld.sshfl [vmem:[#allocation1 + $0x8] sm:$0xff pattern:$0x75316420]
          %203 = vmatpush.xpose.msra.mxu0 0.0
          %204 = vmatpush.xpose.msra.mxu0 0.0
          %205 = vmatpush.xpose.msra.mxu0 0.0
          %206 = vmatpush.xpose.msra.mxu0 0.0
          %207 = vmatpush.xpose.msra.mxu0 0.0
          %208 = vmatpush.xpose.msra.mxu0 0.0
          %209 = vmatpush.xpose.msra.mxu0 0.0
          %210 = vmatpush.xpose.msra.mxu0 0.0
          %211 = vmatpush.xpose.msra.mxu0 0.0
          %212 = vmatpush.xpose.msra.mxu0 0.0
          %213 = vmatpush.xpose.msra.mxu0 0.0
          %214 = vmatpush.xpose.msra.mxu0 0.0
          %215 = vmatpush.xpose.msra.mxu0 0.0
          %216 = vmatpush.xpose.msra.mxu0 0.0
          %217 = vmatpush.xpose.msra.mxu0 0.0
          %218 = vmatpush.xpose.msra.mxu0 %v199
          %219 = vmatmul.f32.gmra.mxu0 %v194
          %v220 = vpop.f32.mrf.mxu0
          %v221 = vadd.f32 0.0, %v220
          %222 = vdwg.mxu0
          %223 = vmatpush.xpose.msra.mxu0 0.0
          %224 = vmatpush.xpose.msra.mxu0 0.0
          %225 = vmatpush.xpose.msra.mxu0 0.0
          %226 = vmatpush.xpose.msra.mxu0 0.0
          %227 = vmatpush.xpose.msra.mxu0 0.0
          %228 = vmatpush.xpose.msra.mxu0 0.0
          %229 = vmatpush.xpose.msra.mxu0 0.0
          %230 = vmatpush.xpose.msra.mxu0 0.0
          %231 = vmatpush.xpose.msra.mxu0 0.0
          %232 = vmatpush.xpose.msra.mxu0 0.0
          %233 = vmatpush.xpose.msra.mxu0 0.0
          %234 = vmatpush.xpose.msra.mxu0 0.0
          %235 = vmatpush.xpose.msra.mxu0 0.0
          %236 = vmatpush.xpose.msra.mxu0 0.0
          %237 = vmatpush.xpose.msra.mxu0 0.0
          %238 = vmatpush.xpose.msra.mxu0 %v200
          %239 = vmatmul.f32.gmra.mxu0 %v195
          %v240 = vpop.f32.mrf.mxu0
          %v241 = vadd.f32 %v221, %v240
          %242 = vdwg.mxu0
          %vm243 = vcmask 27648
          %v244 = vsel %vm243, %v241, inf
          %245 = vmin.xlane.f32.xlu0 %v244
          %v246 = vpop.xlane.xlu0 %245
          %v247 = vsub.f32 %v246, %v241
          %v248 = vmul.f32 %v247, 1.442695
          %v249 = vpow.pop %v248
          %v250 = vsel %vm243, %v249, 0.0
          %251 = vadd.xlane.f32.xlu0 %v250
          %v252 = vpop.xlane.xlu0 %251
          %v253 = vrcp.pop %v252
          %v254 = vmul.f32 %v249, %v253
          %255 = vst.msk [vmem:[#allocation2] sm:$0xf] %vm243, %v254
        $region36: #{tpu_custom_call.1} parent=27 // pred_fallthru
          _
        %v256 = vld [vmem:[%s164] sm:$0xff]
        %v257 = vld [vmem:[#allocation2] sm:$0xf]
        %259 = vst [vmem:[#allocation1] ss:$2 sm:$0xff] %v256
        %v260 = vld.sshfl [vmem:[#allocation1] sm:$0xff pattern:$0x75316420]
        %v261 = vld.sshfl [vmem:[#allocation1 + $0x8] sm:$0xff pattern:$0x75316420]
        %vm262 = vcmask 31744
        %v264 = vsel %vm262, %v257, 0
        %vm266 = vcmask 1043456
        %v267 = vsel %vm266, %v260, 0
        %v269 = vsel %vm266, %v261, 0
        %271 = vmatpush.msra.mxu0 0.0
        %272 = vmatpush.msra.mxu0 0.0
        %273 = vmatpush.msra.mxu0 0.0
        %274 = vmatpush.msra.mxu0 0.0
        %275 = vmatpush.msra.mxu0 0.0
        %276 = vmatpush.msra.mxu0 0.0
        %277 = vmatpush.msra.mxu0 0.0
        %278 = vmatpush.msra.mxu0 0.0
        %279 = vmatpush.msra.mxu0 0.0
        %280 = vmatpush.msra.mxu0 0.0
        %281 = vmatpush.msra.mxu0 0.0
        %282 = vmatpush.msra.mxu0 0.0
        %283 = vmatpush.msra.mxu0 0.0
        %284 = vmatpush.msra.mxu0 0.0
        %285 = vmatpush.msra.mxu0 0.0
        %286 = vmatpush.msra.mxu0 %v267
        %287 = vmatmul.f32.gmra.mxu0 %v264
        %v288 = vpop.f32.mrf.mxu0
        %v289 = vadd.f32 0.0, %v288
        %290 = vdwg.mxu0
        %291 = vmatpush.msra.mxu0 0.0
        %292 = vmatpush.msra.mxu0 0.0
        %293 = vmatpush.msra.mxu0 0.0
        %294 = vmatpush.msra.mxu0 0.0
        %295 = vmatpush.msra.mxu0 0.0
        %296 = vmatpush.msra.mxu0 0.0
        %297 = vmatpush.msra.mxu0 0.0
        %298 = vmatpush.msra.mxu0 0.0
        %299 = vmatpush.msra.mxu0 0.0
        %300 = vmatpush.msra.mxu0 0.0
        %301 = vmatpush.msra.mxu0 0.0
        %302 = vmatpush.msra.mxu0 0.0
        %303 = vmatpush.msra.mxu0 0.0
        %304 = vmatpush.msra.mxu0 0.0
        %305 = vmatpush.msra.mxu0 0.0
        %306 = vmatpush.msra.mxu0 %v269
        %307 = vmatmul.f32.gmra.mxu0 %v264
        %v308 = vpop.f32.mrf.mxu0
        %v309 = vadd.f32 0.0, %v308
        %310 = vdwg.mxu0
        %s311 = sld [smem:[#allocation3]]
        %v312 = vstv %s311
        %v313 = vmul.f32 %v312, %v289
        %v314 = vmul.f32 %v312, %v309
        %315 = vst [vmem:[#allocation1] ss:$2 sm:$0xff] %v256
        %v316 = vld.sshfl [vmem:[#allocation1] sm:$0xff pattern:$0x75316420]
        %v317 = vld.sshfl [vmem:[#allocation1 + $0x8] sm:$0xff pattern:$0x75316420]
        %v320 = vadd.f32 %v313, %v316
        %v321 = vadd.f32 %v314, %v317
        %v324 = vrot.slane %v321, 4
        %v325 = vsel %vm266, %v320, %v324
        %327 = vst [vmem:[%s185] sm:$0xff] %v325
        %s328 = sand.u32 %s98, 1
        %s329 = scalar_lea.sflag [#allocation6], %s328
        %s330 = sand.u32 %s98, 1
        %s331 = smul.addr %s330, 8
        %s332 = scalar_lea.vmem [#allocation7], %s331
        // Predicated region
        $region37: #{tpu_custom_call.1} parent=27 // pred_check
          %p333 = pneg %p108
        $region38: #{tpu_custom_call.1} parent=27 // pred_check_branch
          %335 = sbr.rel (%p333) target = $region40
        $region39: #{tpu_custom_call.1} parent=27 // pred_region
          %s336 = smul.u32 2, %s27
          %338 = vsyncadd %s329, 0
          %s339 = smul.addr %s26, 2
          %s340 = sadd.s32 %s336, %s339
          %s341 = smul.addr %s25, 2
          %s342 = sadd.s32 %s340, %s341
          %s343 = smul.addr %s342, 4
          %s344 = scalar_lea.hbm %s2, %s343
          %s346 = sshll.u32 %s332, 4
          %s347 = int_to_ptr.vmem [resolvable:$true] %s346
          %s348 = sshll.u32 %s344, 4
          %s349 = int_to_ptr.hbm [resolvable:$true] %s348
          %351 = dma.vmem_to_hbm [thread:$0]  %s347, 128, %s349, %s329
        $region40: #{tpu_custom_call.1} parent=27 // pred_fallthru
          _
      $region28: #{tpu_custom_call.1} parent=5 // pred_fallthru
        _
      %p352 = scmp.le.s32.totalorder 2, %s15
      // Predicated region
      $region41: #{tpu_custom_call.1} parent=5 // pred_check
        %p353 = pneg %p352
      $region42: #{tpu_custom_call.1} parent=5 // pred_check_branch
        %355 = sbr.rel (%p353) target = $region44
      $region43: #{tpu_custom_call.1} parent=5 // pred_region
        %s356 = ssub.s32 %s15, 2
        // Predicated region
        $region45: #{tpu_custom_call.1} parent=43 // pred_check
          %p357 = pneg %p114
        $region46: #{tpu_custom_call.1} parent=43 // pred_check_branch
          %359 = sbr.rel (%p357) target = $region48
        $region47: #{tpu_custom_call.1} parent=43 // pred_region
          %s360 = sand.u32 %s99, 1
          %s361 = scalar_lea.sflag [#allocation6], %s360
          %s362 = sand.u32 %s99, 1
          %s363 = smul.addr %s362, 8
          %s364 = scalar_lea.vmem [#allocation7], %s363
          %366 = dma.done %s361, 128
        $region48: #{tpu_custom_call.1} parent=43 // pred_fallthru
          _
      $region44: #{tpu_custom_call.1} parent=5 // pred_fallthru
        _
    $region6: #{tpu_custom_call.1} parent=1 // loop_footer
      %s19 = sadd.s32 1, %s15
    $region7: #{tpu_custom_call.1} parent=1 // loop_footer_branch
      %14 = sbr.rel target = $region3
    $region8: #{tpu_custom_call.1} parent=1 // loop_exit
      _
    %367 = vsyncpa [#allocation5], 1
    %s368 = scalar_lea.sflag [#allocation5], 1
    %369 = vsyncpa %s368, 1
    %370 = vsyncpa [#allocation6], 1
    %s371 = scalar_lea.sflag [#allocation6], 1
    %372 = vsyncpa %s371, 1

</llo_original>
